<compile_context>
chip_gen: v7x
topology: tpu7x:2x2x1
jax: 0.10.0
libtpu: 0.0.40
codegen_flags: <defaults>
</compile_context>

<pallas_src>
import functools

import jax
import jax.numpy as jnp
from jax.experimental import pallas as pl
from jax.experimental.pallas import tpu as pltpu


def _round_up(x, m):
    return ((x + m - 1) // m) * m


def _pick_block_rows(n, requested):
    """Rows per grid step: multiple of 8, capped by `requested`; when the batch
    is large enough, keep at least two row blocks so the 'parallel' grid axis
    can shard across v7x's two TensorCores."""
    nb = min(requested, _round_up(n, 8))
    if n > 16:
        nb = min(nb, _round_up((n + 1) // 2, 8))
    return max(8, _round_up(nb, 8))


def _focal_loss_kernel(x_ref, t_ref, *rest, n_valid, block_rows, gamma, has_alpha):
    if has_alpha:
        a_ref, out_ref = rest
    else:
        a_ref = None
        (out_ref,) = rest

    pid = pl.program_id(0)

    x = x_ref[...].astype(jnp.float32)   # (NB, C) logits (upcast if bf16 storage)
    t = t_ref[...]                       # (NB, 1) int32 targets
    nb, c = x.shape

    # Target-class gather via select: (1, C) iota broadcasts against (NB, 1)
    # targets; no float mask, no full-width multiply, no full-width iota.
    ids = jax.lax.broadcasted_iota(jnp.int32, (1, c), 1)
    eq = ids == t                                                     # (NB, C)
    x_t_raw = jnp.sum(jnp.where(eq, x, 0.0), axis=1, keepdims=True)   # x[i, t_i]

    # Numerically stable log-softmax evaluated only at the target class.
    m = jnp.max(x, axis=1, keepdims=True)                             # (NB, 1)
    denom = jnp.sum(jnp.exp(x - m), axis=1, keepdims=True)            # (NB, 1)
    log_p = (x_t_raw - m) - jnp.log(denom)                            # log softmax@t
    probs = jnp.exp(log_p)                                            # softmax@t

    one_minus = 1.0 - probs
    if gamma == 2.0:
        focal = one_minus * one_minus                                 # square, no pow
    elif gamma == 1.0:
        focal = one_minus
    elif gamma == 0.0:
        focal = jnp.ones_like(one_minus)
    else:
        focal = jnp.power(one_minus, jnp.float32(gamma))

    loss = -(focal * log_p)                                           # (NB, 1)
    if has_alpha:
        loss = loss * a_ref[...].astype(jnp.float32)                  # alpha[t_i]

    # Zero rows past N: the ragged last block reads undefined logits/targets;
    # where() is a select, so any NaN/Inf in the untaken branch is discarded.
    row = pid * block_rows + jax.lax.broadcasted_iota(jnp.int32, loss.shape, 0)
    loss = jnp.where(row < n_valid, loss, 0.0)

    # Per-block partial SUM into a lane-dense tile; wrapper reads [:, 0, 0],
    # sums across blocks and divides by N exactly once.
    partial = jnp.sum(loss, keepdims=True)                            # (1, 1)
    out_ref[...] = jnp.broadcast_to(partial, out_ref.shape)           # (1, 1, 128)


def focal_loss(inputs, targets, alpha=None, gamma=2.0, size_average=True,
               block_rows=4096):
    """inputs: (N, C) float logits (f32 or bf16); targets: (N,) int labels."""
    N, C = inputs.shape
    NB = _pick_block_rows(N, block_rows)
    G = -(-N // NB)

    t2d = targets.astype(jnp.int32).reshape(N, 1)

    in_specs = [
        pl.BlockSpec((NB, C), lambda i: (i, 0)),   # logits tile (unpadded C)
        pl.BlockSpec((NB, 1), lambda i: (i, 0)),   # targets column
    ]
    args = [inputs, t2d]

    has_alpha = alpha is not None
    if has_alpha:
        alpha_vec = jnp.asarray(alpha, jnp.float32).reshape(-1)
        a_rows = jnp.take(alpha_vec, targets).reshape(N, 1).astype(jnp.float32)
        in_specs.append(pl.BlockSpec((NB, 1), lambda i: (i, 0)))      # alpha[t] column
        args.append(a_rows)

    kernel = functools.partial(
        _focal_loss_kernel, n_valid=N, block_rows=NB,
        gamma=float(gamma), has_alpha=has_alpha)

    # Derived VMEM budget: double-buffered logits tile dominates; leave headroom
    # under v7x's 64 MiB physical VMEM.
    tile_bytes = NB * C * inputs.dtype.itemsize
    vmem_limit = int(min(64 * 1024 * 1024, max(16 * 1024 * 1024, 6 * tile_bytes)))

    partials = pl.pallas_call(
        kernel,
        out_shape=jax.ShapeDtypeStruct((G, 1, 128), jnp.float32),
        grid=(G,),
        in_specs=in_specs,
        out_specs=pl.BlockSpec((1, 1, 128), lambda i: (i, 0, 0)),
        compiler_params=pltpu.CompilerParams(
            dimension_semantics=("parallel",),     # independent row blocks
            vmem_limit_bytes=vmem_limit,
        ),
    )(*args)

    total = jnp.sum(partials[:, 0, 0])
    return total / N if size_average else total


def _focal_loss_ref(inputs, targets, alpha=None, gamma=2.0, size_average=True):
    N, C = inputs.shape
    if alpha is None:
        alpha = jnp.ones((C,), jnp.float32)
    else:
        alpha = jnp.asarray(alpha, jnp.float32).reshape(-1)
    p = jax.nn.softmax(inputs.astype(jnp.float32), axis=1)
    probs = p[jnp.arange(N), targets]
    a = alpha[targets]
    batch_loss = -a * (1.0 - probs) ** gamma * jnp.log(probs)
    return jnp.mean(batch_loss) if size_average else jnp.sum(batch_loss)


if __name__ == "__main__":
    key = jax.random.PRNGKey(0)
    k1, k2, k3, k4, k5 = jax.random.split(key, 5)

    # FEMNIST-like: 62 classes, small batch. alpha=None path (ones).
    N, C = 8, 62
    inputs = jax.random.normal(k1, (N, C), dtype=jnp.float32)
    targets = jax.random.randint(k2, (N,), 0, C, dtype=jnp.int32)

    loss = focal_loss(inputs, targets)
    jax.block_until_ready(loss)
    ref = _focal_loss_ref(inputs, targets)
    assert jnp.allclose(loss, ref, rtol=1e-5, atol=1e-6), (loss, ref)

    # Second case exercises the row grid + ragged last block (N % NB != 0),
    # plus a per-class alpha vector (gathered in the wrapper).
    N2, C2 = 50, 62
    inputs2 = jax.random.normal(k3, (N2, C2), dtype=jnp.float32)
    targets2 = jax.random.randint(k4, (N2,), 0, C2, dtype=jnp.int32)
    alpha2 = jax.random.uniform(k5, (C2,), minval=0.25, maxval=2.0, dtype=jnp.float32)

    loss2 = focal_loss(inputs2, targets2, alpha=alpha2, block_rows=16)
    jax.block_until_ready(loss2)
    ref2 = _focal_loss_ref(inputs2, targets2, alpha=alpha2)
    assert jnp.allclose(loss2, ref2, rtol=1e-5, atol=1e-6), (loss2, ref2)

    # size_average=False (sum reduction) path.
    loss3 = focal_loss(inputs2, targets2, alpha=alpha2, size_average=False)
    jax.block_until_ready(loss3)
    ref3 = _focal_loss_ref(inputs2, targets2, alpha=alpha2, size_average=False)
    assert jnp.allclose(loss3, ref3, rtol=1e-5, atol=1e-5), (loss3, ref3)

    print("KERNEL_OK")
</pallas_src>

<mosaic_0001>
module attributes {stable_mosaic.version = 11 : i64} {
  func.func @_focal_loss_kernel(%arg0: i32, %arg1: memref<8x62xf32, #tpu.memory_space<vmem>>, %arg2: memref<8x1xi32, #tpu.memory_space<vmem>>, %arg3: memref<1x1x128xf32, #tpu.memory_space<vmem>>) attributes {dimension_semantics = [#tpu.dimension_semantics<parallel>], iteration_bounds = array<i64: 1>, scalar_prefetch = 0 : i64, scratch_operands = 0 : i64, tpu.core_type = #tpu.core_type<tc>, window_params = [{transform_indices = @transform_0, window_bounds = array<i64: 8, 62>}, {transform_indices = @transform_1, window_bounds = array<i64: 8, 1>}, {transform_indices = @transform_2, window_bounds = array<i64: 1, 1, 128>}]} {
    %c0 = arith.constant 0 : index
    %c0_0 = arith.constant 0 : index
    %0 = vector.load %arg1[%c0, %c0_0] : memref<8x62xf32, #tpu.memory_space<vmem>>, vector<8x62xf32>
    %c0_1 = arith.constant 0 : index
    %c0_2 = arith.constant 0 : index
    %1 = vector.load %arg2[%c0_1, %c0_2] : memref<8x1xi32, #tpu.memory_space<vmem>>, vector<8x1xi32>
    %2 = tpu.iota {dimensions = array<i32: 1>} : vector<1x62xi32>
    %3 = vector.broadcast %2 : vector<1x62xi32> to vector<8x62xi32>
    %4 = vector.broadcast %1 : vector<8x1xi32> to vector<8x62xi32>
    %5 = arith.cmpi eq, %3, %4 : vector<8x62xi32>
    %cst = arith.constant 0.000000e+00 : f32
    %6 = vector.broadcast %cst : f32 to vector<8x62xf32>
    %7 = arith.select %5, %0, %6 : vector<8x62xi1>, vector<8x62xf32>
    %cst_3 = arith.constant dense<0.000000e+00> : vector<8xf32>
    %8 = vector.multi_reduction <add>, %7, %cst_3 [1] : vector<8x62xf32> to vector<8xf32>
    %9 = vector.shape_cast %8 : vector<8xf32> to vector<8x1xf32>
    %cst_4 = arith.constant dense<0xFF800000> : vector<8xf32>
    %10 = vector.multi_reduction <maximumf>, %0, %cst_4 [1] : vector<8x62xf32> to vector<8xf32>
    %11 = vector.shape_cast %10 : vector<8xf32> to vector<8x1xf32>
    %12 = vector.broadcast %11 : vector<8x1xf32> to vector<8x62xf32>
    %13 = arith.subf %0, %12 : vector<8x62xf32>
    %14 = math.exp %13 : vector<8x62xf32>
    %cst_5 = arith.constant dense<0.000000e+00> : vector<8xf32>
    %15 = vector.multi_reduction <add>, %14, %cst_5 [1] : vector<8x62xf32> to vector<8xf32>
    %16 = vector.shape_cast %15 : vector<8xf32> to vector<8x1xf32>
    %17 = arith.subf %9, %11 : vector<8x1xf32>
    %18 = math.log %16 : vector<8x1xf32>
    %19 = arith.subf %17, %18 : vector<8x1xf32>
    %20 = math.exp %19 : vector<8x1xf32>
    %cst_6 = arith.constant 1.000000e+00 : f32
    %21 = vector.broadcast %cst_6 : f32 to vector<8x1xf32>
    %22 = arith.subf %21, %20 : vector<8x1xf32>
    %23 = arith.mulf %22, %22 : vector<8x1xf32>
    %24 = arith.mulf %23, %19 : vector<8x1xf32>
    %cst_7 = arith.constant 0.000000e+00 : f32
    %25 = vector.broadcast %cst_7 : f32 to vector<8x1xf32>
    %26 = arith.subf %25, %24 : vector<8x1xf32>
    %c8_i32 = arith.constant 8 : i32
    %27 = arith.muli %arg0, %c8_i32 : i32
    %28 = tpu.iota {dimensions = array<i32: 0>} : vector<8x1xi32>
    %29 = vector.broadcast %27 : i32 to vector<8x1xi32>
    %30 = arith.addi %29, %28 : vector<8x1xi32>
    %c8_i32_8 = arith.constant 8 : i32
    %31 = vector.broadcast %c8_i32_8 : i32 to vector<8x1xi32>
    %32 = arith.cmpi slt, %30, %31 : vector<8x1xi32>
    %cst_9 = arith.constant 0.000000e+00 : f32
    %33 = vector.broadcast %cst_9 : f32 to vector<8x1xf32>
    %34 = arith.select %32, %26, %33 : vector<8x1xi1>, vector<8x1xf32>
    %35 = vector.shape_cast %34 : vector<8x1xf32> to vector<1x8x1xf32>
    %cst_10 = arith.constant dense<0.000000e+00> : vector<1xf32>
    %36 = vector.multi_reduction <add>, %35, %cst_10 [1, 2] : vector<1x8x1xf32> to vector<1xf32>
    %37 = vector.shape_cast %36 : vector<1xf32> to vector<1x1x1xf32>
    %38 = vector.extract %37[0, 0, 0] : f32 from vector<1x1x1xf32>
    %39 = vector.broadcast %38 : f32 to vector<1x1xf32>
    %40 = vector.shape_cast %39 : vector<1x1xf32> to vector<1x1x1xf32>
    %41 = vector.broadcast %40 : vector<1x1x1xf32> to vector<1x1x128xf32>
    %c0_11 = arith.constant 0 : index
    %c0_12 = arith.constant 0 : index
    %c0_13 = arith.constant 0 : index
    %42 = vector.load %arg3[%c0_11, %c0_12, %c0_13] : memref<1x1x128xf32, #tpu.memory_space<vmem>>, vector<1x1x128xf32>
    tpu.vector_store %arg3[%c0_11, %c0_12, %c0_13], %41 {strides = array<i32>} : memref<1x1x128xf32, #tpu.memory_space<vmem>>, vector<1x1x128xf32>,
    return
  }
  func.func @transform_0(%arg0: i32) -> (i32, i32) {
    %c0_i32 = arith.constant 0 : i32
    %c0_i32_0 = arith.constant 0 : i32
    return %arg0, %c0_i32 : i32, i32
  }
  func.func @transform_1(%arg0: i32) -> (i32, i32) {
    %c0_i32 = arith.constant 0 : i32
    %c0_i32_0 = arith.constant 0 : i32
    return %arg0, %c0_i32 : i32, i32
  }
  func.func @transform_2(%arg0: i32) -> (i32, i32, i32) {
    %c0_i32 = arith.constant 0 : i32
    %c0_i32_0 = arith.constant 0 : i32
    %c0_i32_1 = arith.constant 0 : i32
    return %arg0, %c0_i32, %c0_i32_0 : i32, i32, i32
  }
}

</mosaic_0001>

<llo_original>
// kernel: tpu_custom_call.1
$region0: #{tpu_custom_call.1}
  #allocation0 [shape = 'u32[]', space=smem, size = 0x4, offset = 0x4, fixed_abs, tag = 'smem constant byte address 0x4 - core index']
  #allocation1 [shape = 'u32[144,128]{1,0:T(1,128)}', space=vmem, size = 0x12000, scoped, tag = 'internal scratch']
  %s0 = inlined_call_operand.vmem [shape: f32[8,62], index: 0, kind: input, shape index: {}]
  %s1 = inlined_call_operand.vmem [shape: s32[8,1], index: 1, kind: input, shape index: {}]
  %s2 = inlined_call_operand.hbm [shape: f32[1,1,128], index: 2, kind: output, shape index: {}]
  %s3 = sld [smem:[#allocation0]]
  $region18: #{tpu_custom_call.1} parent=0
    _
  %s5 = ssub.s32 1, %s3
  %s6 = scalar_select 0, %s5, %s3
  $region1: #{tpu_custom_call.1} parent=0
    #allocation2 [shape = 'u8[512]{0}', space=vmem, size = 0x400, scoped, tag = 'output window, operand 0, single buffered']
    #allocation3 [shape = 's32[1]{0}', space=sflag, size = 0x4, scoped, tag = 'scoped memory for tpu_custom_call.1']
    %7 = vsyncpa [#allocation3], 0
    // Predicated region
    $region2: #{tpu_custom_call.1} parent=1 // pred_check
      _
    $region3: #{tpu_custom_call.1} parent=1 // pred_check_branch
      %9 = sbr.rel (0) target = $region5
    $region4: #{tpu_custom_call.1} parent=1 // pred_region
      _
    $region5: #{tpu_custom_call.1} parent=1 // pred_fallthru
      _
    // Predicated region
    $region6: #{tpu_custom_call.1} parent=1 // pred_check
      _
    $region7: #{tpu_custom_call.1} parent=1 // pred_check_branch
      %11 = sbr.rel (0) target = $region9
    $region8: #{tpu_custom_call.1} parent=1 // pred_region
      _
    $region9: #{tpu_custom_call.1} parent=1 // pred_fallthru
      _
    %v12 = vld [vmem:[%s0] sm:$0xff]
    %v13 = vld [vmem:[%s1] sm:$0xff]
    %v14 = vlaneseq
    %v15 = vand.u32 %v14, 127
    %16 = vset.pattern.permute.xlu0 0
    %17 = vperm.xlu0 %16, %v13
    %v18 = vpop.permute.xlu0 %17
    %vm19 = vcmp.eq.s32.totalorder %v15, %v18
    %v20 = vsel %vm19, %v12, 0.0
    %vm21 = vcmask 506880
    %v22 = vsel %vm21, %v20, 0.0
    %23 = vadd.xlane.f32.xlu0 %v22
    %v24 = vpop.xlane.xlu0 %23
    %v25 = vsel %vm21, %v12, -inf
    %26 = vmax.xlane.f32.xlu0 %v25
    %v27 = vpop.xlane.xlu0 %26
    %v28 = vsub.f32 %v12, %v27
    %v29 = vmul.f32 %v28, 1.442695
    %v30 = vpow.pop %v29
    %v31 = vsel %vm21, %v30, 0.0
    %32 = vadd.xlane.f32.xlu0 %v31
    %v33 = vpop.xlane.xlu0 %32
    %v34 = vsub.f32 %v24, %v27
    %v35 = vlog2.pop %v33
    %v36 = vmul.f32 %v35, 0.6931472
    %v37 = vsub.f32 %v34, %v36
    %v38 = vmul.f32 %v37, 1.442695
    %v39 = vpow.pop %v38
    %v40 = vsub.f32 1.0, %v39
    %v41 = vmul.f32 %v40, %v40
    %v42 = vmul.f32 %v41, %v37
    %v43 = vsub.f32 0.0, %v42
    %s44 = smul.u32 0, 8
    %v45 = vlaneseq
    %v46 = vshrl.u32 %v45, 7
    %v47 = vstv %s44
    %v48 = vadd.s32 %v47, %v46
    %vm49 = vcmp.lt.s32.totalorder %v48, 8
    %v50 = vsel %vm49, %v43, 0.0
    %vm51 = vcmask 7168
    %v52 = vsel %vm51, %v50, 0.0
    %53 = vadd.xlane.f32.xlu0 %v52
    %v54 = vpop.xlane.xlu0 %53
    %v55 = vrot.slane %v54, 4
    %v56 = vadd.f32 %v54, %v55
    %v57 = vrot.slane %v56, 2
    %v58 = vadd.f32 %v56, %v57
    %v59 = vrot.slane %v58, 1
    %v60 = vadd.f32 %v58, %v59
    %s61 = vtos %v60
    %v62 = vstv %s61
    %63 = vst [vmem:[#allocation2] sm:$0x1] %v62
    // Predicated region
    $region10: #{tpu_custom_call.1} parent=1 // pred_check
      _
    $region11: #{tpu_custom_call.1} parent=1 // pred_check_branch
      %65 = sbr.rel (0) target = $region13
    $region12: #{tpu_custom_call.1} parent=1 // pred_region
      %s67 = ssub.s32 16, 16
      %68 = vsyncadd [#allocation3], %s67
      %s70 = sshll.u32 [#allocation2], 4
      %s71 = int_to_ptr.vmem [resolvable:$true] %s70
      %73 = dma.vmem_to_hbm [thread:$0]  %s71, 16, %s2, [#allocation3]
    $region13: #{tpu_custom_call.1} parent=1 // pred_fallthru
      _
    // Predicated region
    $region14: #{tpu_custom_call.1} parent=1 // pred_check
      _
    $region15: #{tpu_custom_call.1} parent=1 // pred_check_branch
      %75 = sbr.rel (0) target = $region17
    $region16: #{tpu_custom_call.1} parent=1 // pred_region
      %76 = dma.done [#allocation3], 16
    $region17: #{tpu_custom_call.1} parent=1 // pred_fallthru
      _
    %77 = vsyncpa [#allocation3], 1

</llo_original>
